<compile_context>
chip_gen: v5e
topology: v5e:2x2
jax: 0.10.0
libtpu: 0.0.40
codegen_flags: <defaults>
</compile_context>

<pallas_src>
import jax
import jax.numpy as jnp
from jax import lax
from jax.experimental import pallas as pl
from jax.experimental.pallas import tpu as pltpu

# Problem constants (from the PyTorch module).
IN_H, IN_W = 16, 16
K = 6            # kernel_size
STRIDE = 2
PAD = 2
OUT_H = (IN_H - 1) * STRIDE - 2 * PAD + K   # 32
OUT_W = (IN_W - 1) * STRIDE - 2 * PAD + K   # 32

# Staging-buffer geometry (built once in the wrapper, one tiny fusion):
#   xbig (18, 100):  xbig[1 + i, 34 + j] = x[i, j // 2]  (column-duplicated x),
#   zeros everywhere else.  The zero borders provide the deconv halo, and the
#   extra 32 zero lanes on each side let every tap be read as one 64-lane-wide
#   static slice whose left half serves even output rows (data at lanes 0..31)
#   and whose right half serves odd output rows (data at lanes 32..63).
XB_ROWS = IN_H + 2     # 18
XB_COLS = 100          # 32 zeros | 36 (2 + 32 + 2 padded xd) | 32 zeros
XD_COL0 = 34           # column where the duplicated image starts inside xbig


def convt_silu_kernel(x_ref, w_ref, b_ref, o_ref):
    """x_ref: (18, 100) f32 VMEM  -- xbig staging buffer (see above)
       w_ref: (36,)     f32 SMEM  -- raw ConvTranspose2d weight, row-major 6x6
       b_ref: (1,)      f32 SMEM  -- bias
       o_ref: (16, 64)  f32 VMEM  -- P[a, k] = y[2a + k//32, k % 32]
                                      (row-major identical to the (32,32) output)
    """
    lane = lax.broadcasted_iota(jnp.int32, (IN_H, 64), 1)
    is_left = lane < 32             # lanes 0..31 -> even output rows (r = 0)
    is_odd = (lane & 1) == 1        # output column parity s

    acc = jnp.zeros((IN_H, 64), jnp.float32)
    for dh in (-1, 0, 1):
        r0 = 1 + dh                 # top row of the 16-row window in xbig
        for dw in (-1, 0, 1):
            # Even output rows read their taps at lanes 0..31 of this slice.
            l_left = x_ref[r0:r0 + IN_H, 34 + 2 * dw: 34 + 2 * dw + 64]
            # Odd output rows read their taps at lanes 32..63 of this slice.
            l_right = x_ref[r0:r0 + IN_H, 2 + 2 * dw: 2 + 2 * dw + 64]
            d = jnp.where(is_left, l_left, l_right)

            kh0 = 6 * (2 * (1 - dh))        # flat index of W[2(1-dh), .]
            kw0 = 2 * (1 - dw)
            w00 = w_ref[kh0 + kw0]          # r=0, s=0
            w01 = w_ref[kh0 + kw0 + 1]      # r=0, s=1
            w10 = w_ref[kh0 + 6 + kw0]      # r=1, s=0
            w11 = w_ref[kh0 + 6 + kw0 + 1]  # r=1, s=1
            wv = jnp.where(is_left,
                           jnp.where(is_odd, w01, w00),
                           jnp.where(is_odd, w11, w10))
            acc = acc + wv * d

    v1 = acc + b_ref[0]
    # Exact SiLU (EUP logistic); approx reciprocal would violate the 1e-5 check.
    o_ref[...] = v1 * jax.nn.sigmoid(v1)


@jax.jit
def conv_transpose_silu(x_nchw, weight, bias):
    """x_nchw: (1, 1, 16, 16), weight: (1, 1, 6, 6) [PyTorch (Cin, Cout, kH, kW)],
    bias: (1,). Returns (1, 1, 32, 32)."""
    x = x_nchw.reshape(IN_H, IN_W).astype(jnp.float32)

    # Only wrapper-side data movement: column-duplicate + zero-border staging.
    # (Replaces both the old jnp.pad fusion and the old post-kernel transpose.)
    xd = jnp.repeat(x, 2, axis=1)                            # (16, 32)
    xbig = jnp.zeros((XB_ROWS, XB_COLS), jnp.float32)
    xbig = lax.dynamic_update_slice(xbig, xd, (1, XD_COL0))  # (18, 100)

    w = weight.reshape(K * K).astype(jnp.float32)            # (36,), no flip
    b = bias.astype(jnp.float32).reshape(1)

    packed = pl.pallas_call(
        convt_silu_kernel,
        out_shape=jax.ShapeDtypeStruct((IN_H, 64), jnp.float32),
        in_specs=[
            pl.BlockSpec(memory_space=pltpu.MemorySpace.VMEM),
            pl.BlockSpec(memory_space=pltpu.MemorySpace.SMEM),
            pl.BlockSpec(memory_space=pltpu.MemorySpace.SMEM),
        ],
        out_specs=pl.BlockSpec(memory_space=pltpu.MemorySpace.VMEM),
    )(xbig, w, b)

    # (16, 64) row-major is bit-identical to (32, 32) row-major: free reshape.
    return packed.reshape(1, 1, OUT_H, OUT_W)


def reference(x_nchw, weight, bias):
    """Pure-JAX reference of ConvTranspose2d + SiLU for correctness check."""
    x = x_nchw.astype(jnp.float32)
    w = weight[0, 0][::-1, ::-1][None, None].astype(jnp.float32)  # (O, I, kH, kW)
    v1 = lax.conv_general_dilated(
        x, w,
        window_strides=(1, 1),
        padding=[(K - 1 - PAD, K - 1 - PAD)] * 2,
        lhs_dilation=(STRIDE, STRIDE),
        dimension_numbers=("NCHW", "OIHW", "NCHW"),
    ) + bias.reshape(1, 1, 1, 1)
    return v1 * jax.nn.sigmoid(v1)


if __name__ == "__main__":
    key = jax.random.PRNGKey(0)
    kx, kw, kb = jax.random.split(key, 3)

    # Deterministic synthetic parameters (shapes from nn.ConvTranspose2d(1,1,6)).
    x1 = jax.random.normal(kx, (1, 1, IN_H, IN_W), dtype=jnp.float32)
    weight = jax.random.normal(kw, (1, 1, K, K), dtype=jnp.float32) * 0.1
    bias = jax.random.normal(kb, (1,), dtype=jnp.float32) * 0.1

    out = conv_transpose_silu(x1, weight, bias)
    out = jax.block_until_ready(out)

    ref = reference(x1, weight, bias)
    assert out.shape == (1, 1, OUT_H, OUT_W), out.shape
    assert jnp.allclose(out, ref, atol=1e-5, rtol=1e-5), float(jnp.abs(out - ref).max())

    print("KERNEL_OK")
</pallas_src>

<mosaic_0001>
module attributes {stable_mosaic.version = 11 : i64} {
  func.func @convt_silu_kernel(%arg0: memref<18x100xf32, #tpu.memory_space<vmem>>, %arg1: memref<36xf32, #tpu.memory_space<smem>>, %arg2: memref<1xf32, #tpu.memory_space<smem>>, %arg3: memref<16x64xf32, #tpu.memory_space<vmem>>) attributes {dimension_semantics = [], scalar_prefetch = 0 : i64, scratch_operands = 0 : i64, tpu.core_type = #tpu.core_type<tc>} {
    %0 = tpu.iota {dimensions = array<i32: 1>} : vector<16x64xi32>
    %c32_i32 = arith.constant 32 : i32
    %1 = vector.broadcast %c32_i32 : i32 to vector<16x64xi32>
    %2 = arith.cmpi slt, %0, %1 : vector<16x64xi32>
    %c1_i32 = arith.constant 1 : i32
    %3 = vector.broadcast %c1_i32 : i32 to vector<16x64xi32>
    %4 = arith.andi %0, %3 : vector<16x64xi32>
    %c1_i32_0 = arith.constant 1 : i32
    %5 = vector.broadcast %c1_i32_0 : i32 to vector<16x64xi32>
    %6 = arith.cmpi eq, %4, %5 : vector<16x64xi32>
    %cst = arith.constant 0.000000e+00 : f32
    %7 = vector.broadcast %cst : f32 to vector<16x64xf32>
    %c0 = arith.constant 0 : index
    %c32 = arith.constant 32 : index
    %8 = vector.load %arg0[%c0, %c32] : memref<18x100xf32, #tpu.memory_space<vmem>>, vector<16x64xf32>
    %c0_1 = arith.constant 0 : index
    %c0_2 = arith.constant 0 : index
    %9 = vector.load %arg0[%c0_1, %c0_2] : memref<18x100xf32, #tpu.memory_space<vmem>>, vector<16x64xf32>
    %10 = arith.select %2, %8, %9 : vector<16x64xi1>, vector<16x64xf32>
    %c28 = arith.constant 28 : index
    %11 = memref.load %arg1[%c28] : memref<36xf32, #tpu.memory_space<smem>>
    %c29 = arith.constant 29 : index
    %12 = memref.load %arg1[%c29] : memref<36xf32, #tpu.memory_space<smem>>
    %c34 = arith.constant 34 : index
    %13 = memref.load %arg1[%c34] : memref<36xf32, #tpu.memory_space<smem>>
    %c35 = arith.constant 35 : index
    %14 = memref.load %arg1[%c35] : memref<36xf32, #tpu.memory_space<smem>>
    %15 = vector.broadcast %12 : f32 to vector<16x64xf32>
    %16 = vector.broadcast %11 : f32 to vector<16x64xf32>
    %17 = arith.select %6, %15, %16 : vector<16x64xi1>, vector<16x64xf32>
    %18 = vector.broadcast %14 : f32 to vector<16x64xf32>
    %19 = vector.broadcast %13 : f32 to vector<16x64xf32>
    %20 = arith.select %6, %18, %19 : vector<16x64xi1>, vector<16x64xf32>
    %21 = arith.select %2, %17, %20 : vector<16x64xi1>, vector<16x64xf32>
    %22 = arith.mulf %21, %10 : vector<16x64xf32>
    %23 = arith.addf %7, %22 : vector<16x64xf32>
    %c0_3 = arith.constant 0 : index
    %c34_4 = arith.constant 34 : index
    %24 = vector.load %arg0[%c0_3, %c34_4] : memref<18x100xf32, #tpu.memory_space<vmem>>, vector<16x64xf32>
    %c0_5 = arith.constant 0 : index
    %c2 = arith.constant 2 : index
    %25 = vector.load %arg0[%c0_5, %c2] : memref<18x100xf32, #tpu.memory_space<vmem>>, vector<16x64xf32>
    %26 = arith.select %2, %24, %25 : vector<16x64xi1>, vector<16x64xf32>
    %c26 = arith.constant 26 : index
    %27 = memref.load %arg1[%c26] : memref<36xf32, #tpu.memory_space<smem>>
    %c27 = arith.constant 27 : index
    %28 = memref.load %arg1[%c27] : memref<36xf32, #tpu.memory_space<smem>>
    %c32_6 = arith.constant 32 : index
    %29 = memref.load %arg1[%c32_6] : memref<36xf32, #tpu.memory_space<smem>>
    %c33 = arith.constant 33 : index
    %30 = memref.load %arg1[%c33] : memref<36xf32, #tpu.memory_space<smem>>
    %31 = vector.broadcast %28 : f32 to vector<16x64xf32>
    %32 = vector.broadcast %27 : f32 to vector<16x64xf32>
    %33 = arith.select %6, %31, %32 : vector<16x64xi1>, vector<16x64xf32>
    %34 = vector.broadcast %30 : f32 to vector<16x64xf32>
    %35 = vector.broadcast %29 : f32 to vector<16x64xf32>
    %36 = arith.select %6, %34, %35 : vector<16x64xi1>, vector<16x64xf32>
    %37 = arith.select %2, %33, %36 : vector<16x64xi1>, vector<16x64xf32>
    %38 = arith.mulf %37, %26 : vector<16x64xf32>
    %39 = arith.addf %23, %38 : vector<16x64xf32>
    %c0_7 = arith.constant 0 : index
    %c36 = arith.constant 36 : index
    %40 = vector.load %arg0[%c0_7, %c36] : memref<18x100xf32, #tpu.memory_space<vmem>>, vector<16x64xf32>
    %c0_8 = arith.constant 0 : index
    %c4 = arith.constant 4 : index
    %41 = vector.load %arg0[%c0_8, %c4] : memref<18x100xf32, #tpu.memory_space<vmem>>, vector<16x64xf32>
    %42 = arith.select %2, %40, %41 : vector<16x64xi1>, vector<16x64xf32>
    %c24 = arith.constant 24 : index
    %43 = memref.load %arg1[%c24] : memref<36xf32, #tpu.memory_space<smem>>
    %c25 = arith.constant 25 : index
    %44 = memref.load %arg1[%c25] : memref<36xf32, #tpu.memory_space<smem>>
    %c30 = arith.constant 30 : index
    %45 = memref.load %arg1[%c30] : memref<36xf32, #tpu.memory_space<smem>>
    %c31 = arith.constant 31 : index
    %46 = memref.load %arg1[%c31] : memref<36xf32, #tpu.memory_space<smem>>
    %47 = vector.broadcast %44 : f32 to vector<16x64xf32>
    %48 = vector.broadcast %43 : f32 to vector<16x64xf32>
    %49 = arith.select %6, %47, %48 : vector<16x64xi1>, vector<16x64xf32>
    %50 = vector.broadcast %46 : f32 to vector<16x64xf32>
    %51 = vector.broadcast %45 : f32 to vector<16x64xf32>
    %52 = arith.select %6, %50, %51 : vector<16x64xi1>, vector<16x64xf32>
    %53 = arith.select %2, %49, %52 : vector<16x64xi1>, vector<16x64xf32>
    %54 = arith.mulf %53, %42 : vector<16x64xf32>
    %55 = arith.addf %39, %54 : vector<16x64xf32>
    %c1 = arith.constant 1 : index
    %c32_9 = arith.constant 32 : index
    %56 = vector.load %arg0[%c1, %c32_9] : memref<18x100xf32, #tpu.memory_space<vmem>>, vector<16x64xf32>
    %c1_10 = arith.constant 1 : index
    %c0_11 = arith.constant 0 : index
    %57 = vector.load %arg0[%c1_10, %c0_11] : memref<18x100xf32, #tpu.memory_space<vmem>>, vector<16x64xf32>
    %58 = arith.select %2, %56, %57 : vector<16x64xi1>, vector<16x64xf32>
    %c16 = arith.constant 16 : index
    %59 = memref.load %arg1[%c16] : memref<36xf32, #tpu.memory_space<smem>>
    %c17 = arith.constant 17 : index
    %60 = memref.load %arg1[%c17] : memref<36xf32, #tpu.memory_space<smem>>
    %c22 = arith.constant 22 : index
    %61 = memref.load %arg1[%c22] : memref<36xf32, #tpu.memory_space<smem>>
    %c23 = arith.constant 23 : index
    %62 = memref.load %arg1[%c23] : memref<36xf32, #tpu.memory_space<smem>>
    %63 = vector.broadcast %60 : f32 to vector<16x64xf32>
    %64 = vector.broadcast %59 : f32 to vector<16x64xf32>
    %65 = arith.select %6, %63, %64 : vector<16x64xi1>, vector<16x64xf32>
    %66 = vector.broadcast %62 : f32 to vector<16x64xf32>
    %67 = vector.broadcast %61 : f32 to vector<16x64xf32>
    %68 = arith.select %6, %66, %67 : vector<16x64xi1>, vector<16x64xf32>
    %69 = arith.select %2, %65, %68 : vector<16x64xi1>, vector<16x64xf32>
    %70 = arith.mulf %69, %58 : vector<16x64xf32>
    %71 = arith.addf %55, %70 : vector<16x64xf32>
    %c1_12 = arith.constant 1 : index
    %c34_13 = arith.constant 34 : index
    %72 = vector.load %arg0[%c1_12, %c34_13] : memref<18x100xf32, #tpu.memory_space<vmem>>, vector<16x64xf32>
    %c1_14 = arith.constant 1 : index
    %c2_15 = arith.constant 2 : index
    %73 = vector.load %arg0[%c1_14, %c2_15] : memref<18x100xf32, #tpu.memory_space<vmem>>, vector<16x64xf32>
    %74 = arith.select %2, %72, %73 : vector<16x64xi1>, vector<16x64xf32>
    %c14 = arith.constant 14 : index
    %75 = memref.load %arg1[%c14] : memref<36xf32, #tpu.memory_space<smem>>
    %c15 = arith.constant 15 : index
    %76 = memref.load %arg1[%c15] : memref<36xf32, #tpu.memory_space<smem>>
    %c20 = arith.constant 20 : index
    %77 = memref.load %arg1[%c20] : memref<36xf32, #tpu.memory_space<smem>>
    %c21 = arith.constant 21 : index
    %78 = memref.load %arg1[%c21] : memref<36xf32, #tpu.memory_space<smem>>
    %79 = vector.broadcast %76 : f32 to vector<16x64xf32>
    %80 = vector.broadcast %75 : f32 to vector<16x64xf32>
    %81 = arith.select %6, %79, %80 : vector<16x64xi1>, vector<16x64xf32>
    %82 = vector.broadcast %78 : f32 to vector<16x64xf32>
    %83 = vector.broadcast %77 : f32 to vector<16x64xf32>
    %84 = arith.select %6, %82, %83 : vector<16x64xi1>, vector<16x64xf32>
    %85 = arith.select %2, %81, %84 : vector<16x64xi1>, vector<16x64xf32>
    %86 = arith.mulf %85, %74 : vector<16x64xf32>
    %87 = arith.addf %71, %86 : vector<16x64xf32>
    %c1_16 = arith.constant 1 : index
    %c36_17 = arith.constant 36 : index
    %88 = vector.load %arg0[%c1_16, %c36_17] : memref<18x100xf32, #tpu.memory_space<vmem>>, vector<16x64xf32>
    %c1_18 = arith.constant 1 : index
    %c4_19 = arith.constant 4 : index
    %89 = vector.load %arg0[%c1_18, %c4_19] : memref<18x100xf32, #tpu.memory_space<vmem>>, vector<16x64xf32>
    %90 = arith.select %2, %88, %89 : vector<16x64xi1>, vector<16x64xf32>
    %c12 = arith.constant 12 : index
    %91 = memref.load %arg1[%c12] : memref<36xf32, #tpu.memory_space<smem>>
    %c13 = arith.constant 13 : index
    %92 = memref.load %arg1[%c13] : memref<36xf32, #tpu.memory_space<smem>>
    %c18 = arith.constant 18 : index
    %93 = memref.load %arg1[%c18] : memref<36xf32, #tpu.memory_space<smem>>
    %c19 = arith.constant 19 : index
    %94 = memref.load %arg1[%c19] : memref<36xf32, #tpu.memory_space<smem>>
    %95 = vector.broadcast %92 : f32 to vector<16x64xf32>
    %96 = vector.broadcast %91 : f32 to vector<16x64xf32>
    %97 = arith.select %6, %95, %96 : vector<16x64xi1>, vector<16x64xf32>
    %98 = vector.broadcast %94 : f32 to vector<16x64xf32>
    %99 = vector.broadcast %93 : f32 to vector<16x64xf32>
    %100 = arith.select %6, %98, %99 : vector<16x64xi1>, vector<16x64xf32>
    %101 = arith.select %2, %97, %100 : vector<16x64xi1>, vector<16x64xf32>
    %102 = arith.mulf %101, %90 : vector<16x64xf32>
    %103 = arith.addf %87, %102 : vector<16x64xf32>
    %c2_20 = arith.constant 2 : index
    %c32_21 = arith.constant 32 : index
    %104 = vector.load %arg0[%c2_20, %c32_21] : memref<18x100xf32, #tpu.memory_space<vmem>>, vector<16x64xf32>
    %c2_22 = arith.constant 2 : index
    %c0_23 = arith.constant 0 : index
    %105 = vector.load %arg0[%c2_22, %c0_23] : memref<18x100xf32, #tpu.memory_space<vmem>>, vector<16x64xf32>
    %106 = arith.select %2, %104, %105 : vector<16x64xi1>, vector<16x64xf32>
    %c4_24 = arith.constant 4 : index
    %107 = memref.load %arg1[%c4_24] : memref<36xf32, #tpu.memory_space<smem>>
    %c5 = arith.constant 5 : index
    %108 = memref.load %arg1[%c5] : memref<36xf32, #tpu.memory_space<smem>>
    %c10 = arith.constant 10 : index
    %109 = memref.load %arg1[%c10] : memref<36xf32, #tpu.memory_space<smem>>
    %c11 = arith.constant 11 : index
    %110 = memref.load %arg1[%c11] : memref<36xf32, #tpu.memory_space<smem>>
    %111 = vector.broadcast %108 : f32 to vector<16x64xf32>
    %112 = vector.broadcast %107 : f32 to vector<16x64xf32>
    %113 = arith.select %6, %111, %112 : vector<16x64xi1>, vector<16x64xf32>
    %114 = vector.broadcast %110 : f32 to vector<16x64xf32>
    %115 = vector.broadcast %109 : f32 to vector<16x64xf32>
    %116 = arith.select %6, %114, %115 : vector<16x64xi1>, vector<16x64xf32>
    %117 = arith.select %2, %113, %116 : vector<16x64xi1>, vector<16x64xf32>
    %118 = arith.mulf %117, %106 : vector<16x64xf32>
    %119 = arith.addf %103, %118 : vector<16x64xf32>
    %c2_25 = arith.constant 2 : index
    %c34_26 = arith.constant 34 : index
    %120 = vector.load %arg0[%c2_25, %c34_26] : memref<18x100xf32, #tpu.memory_space<vmem>>, vector<16x64xf32>
    %c2_27 = arith.constant 2 : index
    %c2_28 = arith.constant 2 : index
    %121 = vector.load %arg0[%c2_27, %c2_28] : memref<18x100xf32, #tpu.memory_space<vmem>>, vector<16x64xf32>
    %122 = arith.select %2, %120, %121 : vector<16x64xi1>, vector<16x64xf32>
    %c2_29 = arith.constant 2 : index
    %123 = memref.load %arg1[%c2_29] : memref<36xf32, #tpu.memory_space<smem>>
    %c3 = arith.constant 3 : index
    %124 = memref.load %arg1[%c3] : memref<36xf32, #tpu.memory_space<smem>>
    %c8 = arith.constant 8 : index
    %125 = memref.load %arg1[%c8] : memref<36xf32, #tpu.memory_space<smem>>
    %c9 = arith.constant 9 : index
    %126 = memref.load %arg1[%c9] : memref<36xf32, #tpu.memory_space<smem>>
    %127 = vector.broadcast %124 : f32 to vector<16x64xf32>
    %128 = vector.broadcast %123 : f32 to vector<16x64xf32>
    %129 = arith.select %6, %127, %128 : vector<16x64xi1>, vector<16x64xf32>
    %130 = vector.broadcast %126 : f32 to vector<16x64xf32>
    %131 = vector.broadcast %125 : f32 to vector<16x64xf32>
    %132 = arith.select %6, %130, %131 : vector<16x64xi1>, vector<16x64xf32>
    %133 = arith.select %2, %129, %132 : vector<16x64xi1>, vector<16x64xf32>
    %134 = arith.mulf %133, %122 : vector<16x64xf32>
    %135 = arith.addf %119, %134 : vector<16x64xf32>
    %c2_30 = arith.constant 2 : index
    %c36_31 = arith.constant 36 : index
    %136 = vector.load %arg0[%c2_30, %c36_31] : memref<18x100xf32, #tpu.memory_space<vmem>>, vector<16x64xf32>
    %c2_32 = arith.constant 2 : index
    %c4_33 = arith.constant 4 : index
    %137 = vector.load %arg0[%c2_32, %c4_33] : memref<18x100xf32, #tpu.memory_space<vmem>>, vector<16x64xf32>
    %138 = arith.select %2, %136, %137 : vector<16x64xi1>, vector<16x64xf32>
    %c0_34 = arith.constant 0 : index
    %139 = memref.load %arg1[%c0_34] : memref<36xf32, #tpu.memory_space<smem>>
    %c1_35 = arith.constant 1 : index
    %140 = memref.load %arg1[%c1_35] : memref<36xf32, #tpu.memory_space<smem>>
    %c6 = arith.constant 6 : index
    %141 = memref.load %arg1[%c6] : memref<36xf32, #tpu.memory_space<smem>>
    %c7 = arith.constant 7 : index
    %142 = memref.load %arg1[%c7] : memref<36xf32, #tpu.memory_space<smem>>
    %143 = vector.broadcast %140 : f32 to vector<16x64xf32>
    %144 = vector.broadcast %139 : f32 to vector<16x64xf32>
    %145 = arith.select %6, %143, %144 : vector<16x64xi1>, vector<16x64xf32>
    %146 = vector.broadcast %142 : f32 to vector<16x64xf32>
    %147 = vector.broadcast %141 : f32 to vector<16x64xf32>
    %148 = arith.select %6, %146, %147 : vector<16x64xi1>, vector<16x64xf32>
    %149 = arith.select %2, %145, %148 : vector<16x64xi1>, vector<16x64xf32>
    %150 = arith.mulf %149, %138 : vector<16x64xf32>
    %151 = arith.addf %135, %150 : vector<16x64xf32>
    %c0_36 = arith.constant 0 : index
    %152 = memref.load %arg2[%c0_36] : memref<1xf32, #tpu.memory_space<smem>>
    %153 = vector.broadcast %152 : f32 to vector<16x64xf32>
    %154 = arith.addf %151, %153 : vector<16x64xf32>
    %155 = arith.negf %154 : vector<16x64xf32>
    %156 = math.exp %155 : vector<16x64xf32>
    %cst_37 = arith.constant 1.000000e+00 : f32
    %157 = vector.broadcast %cst_37 : f32 to vector<16x64xf32>
    %158 = arith.addf %157, %156 : vector<16x64xf32>
    %159 = arith.divf %157, %158 : vector<16x64xf32>
    %160 = arith.mulf %154, %159 : vector<16x64xf32>
    %c0_38 = arith.constant 0 : index
    %c0_39 = arith.constant 0 : index
    %161 = vector.load %arg3[%c0_38, %c0_39] : memref<16x64xf32, #tpu.memory_space<vmem>>, vector<16x64xf32>
    tpu.vector_store %arg3[%c0_38, %c0_39], %160 {strides = array<i32>} : memref<16x64xf32, #tpu.memory_space<vmem>>, vector<16x64xf32>,
    return
  }
}

</mosaic_0001>

<llo_original>
// kernel: conv_transpose_silu.1
$region0: #{conv_transpose_silu.1}
  #allocation0 [shape = 'u32[]', space=smem, size = 0x4, offset = 0x4, fixed_abs, tag = 'smem constant byte address 0x4 - core index']
  #allocation1 [shape = 'u32[72,128]{1,0:T(1,128)}', space=vmem, size = 0x9000, scoped, tag = 'internal scratch']
  #allocation2 [shape = 'f32[1]{0:T(128)S(6)}', space=smem, size = 0x200, scoped, tag = 'scoped memory for conv_transpose_silu.1']
  %s0 = inlined_call_operand.vmem [shape: f32[18,100], index: 0, kind: input, shape index: {}]
  %s1 = inlined_call_operand.vmem [shape: f32[36], index: 1, kind: input, shape index: {}]
  %s2 = inlined_call_operand.<no memory space> [shape: f32[1], index: 2, kind: input, shape index: {}]
  %s3 = inlined_call_operand.vmem [shape: f32[16,64], index: 3, kind: output, shape index: {}]
  %s4 = sld [smem:[#allocation0]]
  $region26: #{conv_transpose_silu.1} parent=0
    _
  %s6 = ssub.s32 1, %s4
  %s7 = scalar_select 0, %s6, %s4
  %8 = sst [smem:[#allocation2]] %s2
  $region1: #{conv_transpose_silu.1} parent=0
    #allocation3 [shape = 'u8[512]{0}', space=smem, size = 0x200, scoped, tag = 'input window, operand 1, single buffered']
    #allocation4 [shape = 's32[1]{0}', space=sflag, size = 0x4, scoped, tag = 'scoped memory for conv_transpose_silu.1']
    %9 = vsyncpa [#allocation4], 0
    // Predicated region
    $region2: #{conv_transpose_silu.1} parent=1 // pred_check
      _
    $region3: #{conv_transpose_silu.1} parent=1 // pred_check_branch
      %11 = sbr.rel (0) target = $region5
    $region4: #{conv_transpose_silu.1} parent=1 // pred_region
      _
    $region5: #{conv_transpose_silu.1} parent=1 // pred_fallthru
      _
    // Predicated region
    $region6: #{conv_transpose_silu.1} parent=1 // pred_check
      _
    $region7: #{conv_transpose_silu.1} parent=1 // pred_check_branch
      %13 = sbr.rel (0) target = $region9
    $region8: #{conv_transpose_silu.1} parent=1 // pred_region
      %15 = vsyncadd [#allocation4], 0
      %s17 = sshll.u32 %s1, 4
      %s18 = int_to_ptr.vmem [resolvable:$true] %s17
      %20 = dma.vmem_to_smem %s18, 16, [#allocation3], [#allocation4]
    $region9: #{conv_transpose_silu.1} parent=1 // pred_fallthru
      _
    // Predicated region
    $region10: #{conv_transpose_silu.1} parent=1 // pred_check
      _
    $region11: #{conv_transpose_silu.1} parent=1 // pred_check_branch
      %22 = sbr.rel (0) target = $region13
    $region12: #{conv_transpose_silu.1} parent=1 // pred_region
      _
    $region13: #{conv_transpose_silu.1} parent=1 // pred_fallthru
      _
    // Predicated region
    $region14: #{conv_transpose_silu.1} parent=1 // pred_check
      _
    $region15: #{conv_transpose_silu.1} parent=1 // pred_check_branch
      %24 = sbr.rel (0) target = $region17
    $region16: #{conv_transpose_silu.1} parent=1 // pred_region
      %26 = dma.done [#allocation4], 16
    $region17: #{conv_transpose_silu.1} parent=1 // pred_fallthru
      _
    %27 = sfence
    %v28 = vlaneseq
    %v29 = vand.u32 %v28, 127
    %vm30 = vcmp.lt.s32.totalorder %v29, 32
    %v31 = vand.u32 %v29, 1
    %vm32 = vcmp.eq.s32.totalorder %v31, 1
    %v33 = vld [vmem:[%s0] sm:$0xff]
    %v34 = vld [vmem:[%s0 + $0x8] sm:$0xff]
    %37 = vrot.lane.b32.xlu0 %v33, 96
    %v38 = vpop.permute.xlu0 %37
    %39 = vrot.lane.b32.xlu0 %v34, 96
    %v40 = vpop.permute.xlu0 %39
    %v43 = vsel %vm30, %v38, %v33
    %v44 = vsel %vm30, %v40, %v34
    %s45 = sld [smem:[#allocation3 + $0x1c]]
    %s46 = sld [smem:[#allocation3 + $0x1d]]
    %s47 = sld [smem:[#allocation3 + $0x22]]
    %s48 = sld [smem:[#allocation3 + $0x23]]
    %v49 = vstv %s46
    %v50 = vstv %s45
    %v51 = vsel %vm32, %v49, %v50
    %v52 = vstv %s48
    %v53 = vstv %s47
    %v54 = vsel %vm32, %v52, %v53
    %v55 = vsel %vm30, %v51, %v54
    %v56 = vmul.f32 %v55, %v43
    %v57 = vmul.f32 %v55, %v44
    %v58 = vadd.f32 %v56, 0.0
    %v59 = vadd.f32 %v57, 0.0
    %60 = vrot.lane.b32.xlu0 %v33, 94
    %v61 = vpop.permute.xlu0 %60
    %62 = vrot.lane.b32.xlu0 %v34, 94
    %v63 = vpop.permute.xlu0 %62
    %66 = vrot.lane.b32.xlu0 %v33, 126
    %v67 = vpop.permute.xlu0 %66
    %68 = vrot.lane.b32.xlu0 %v34, 126
    %v69 = vpop.permute.xlu0 %68
    %v72 = vsel %vm30, %v61, %v67
    %v73 = vsel %vm30, %v63, %v69
    %s74 = sld [smem:[#allocation3 + $0x1a]]
    %s75 = sld [smem:[#allocation3 + $0x1b]]
    %s76 = sld [smem:[#allocation3 + $0x20]]
    %s77 = sld [smem:[#allocation3 + $0x21]]
    %v78 = vstv %s75
    %v79 = vstv %s74
    %v80 = vsel %vm32, %v78, %v79
    %v81 = vstv %s77
    %v82 = vstv %s76
    %v83 = vsel %vm32, %v81, %v82
    %v84 = vsel %vm30, %v80, %v83
    %v85 = vmul.f32 %v84, %v72
    %v86 = vmul.f32 %v84, %v73
    %v87 = vadd.f32 %v58, %v85
    %v88 = vadd.f32 %v59, %v86
    %89 = vrot.lane.b32.xlu0 %v33, 92
    %v90 = vpop.permute.xlu0 %89
    %91 = vrot.lane.b32.xlu0 %v34, 92
    %v92 = vpop.permute.xlu0 %91
    %95 = vrot.lane.b32.xlu0 %v33, 124
    %v96 = vpop.permute.xlu0 %95
    %97 = vrot.lane.b32.xlu0 %v34, 124
    %v98 = vpop.permute.xlu0 %97
    %v101 = vsel %vm30, %v90, %v96
    %v102 = vsel %vm30, %v92, %v98
    %s103 = sld [smem:[#allocation3 + $0x18]]
    %s104 = sld [smem:[#allocation3 + $0x19]]
    %s105 = sld [smem:[#allocation3 + $0x1e]]
    %s106 = sld [smem:[#allocation3 + $0x1f]]
    %v107 = vstv %s104
    %v108 = vstv %s103
    %v109 = vsel %vm32, %v107, %v108
    %v110 = vstv %s106
    %v111 = vstv %s105
    %v112 = vsel %vm32, %v110, %v111
    %v113 = vsel %vm30, %v109, %v112
    %v114 = vmul.f32 %v113, %v101
    %v115 = vmul.f32 %v113, %v102
    %v116 = vadd.f32 %v87, %v114
    %v117 = vadd.f32 %v88, %v115
    %v118 = vld [vmem:[%s0 + $0x1] sm:$0xff]
    %v119 = vld [vmem:[%s0 + $0x9] sm:$0xff]
    %122 = vrot.lane.b32.xlu0 %v118, 96
    %v123 = vpop.permute.xlu0 %122
    %124 = vrot.lane.b32.xlu0 %v119, 96
    %v125 = vpop.permute.xlu0 %124
    %v128 = vsel %vm30, %v123, %v118
    %v129 = vsel %vm30, %v125, %v119
    %s130 = sld [smem:[#allocation3 + $0x10]]
    %s131 = sld [smem:[#allocation3 + $0x11]]
    %s132 = sld [smem:[#allocation3 + $0x16]]
    %s133 = sld [smem:[#allocation3 + $0x17]]
    %v134 = vstv %s131
    %v135 = vstv %s130
    %v136 = vsel %vm32, %v134, %v135
    %v137 = vstv %s133
    %v138 = vstv %s132
    %v139 = vsel %vm32, %v137, %v138
    %v140 = vsel %vm30, %v136, %v139
    %v141 = vmul.f32 %v140, %v128
    %v142 = vmul.f32 %v140, %v129
    %v143 = vadd.f32 %v116, %v141
    %v144 = vadd.f32 %v117, %v142
    %145 = vrot.lane.b32.xlu0 %v118, 94
    %v146 = vpop.permute.xlu0 %145
    %147 = vrot.lane.b32.xlu0 %v119, 94
    %v148 = vpop.permute.xlu0 %147
    %151 = vrot.lane.b32.xlu0 %v118, 126
    %v152 = vpop.permute.xlu0 %151
    %153 = vrot.lane.b32.xlu0 %v119, 126
    %v154 = vpop.permute.xlu0 %153
    %v157 = vsel %vm30, %v146, %v152
    %v158 = vsel %vm30, %v148, %v154
    %s159 = sld [smem:[#allocation3 + $0xe]]
    %s160 = sld [smem:[#allocation3 + $0xf]]
    %s161 = sld [smem:[#allocation3 + $0x14]]
    %s162 = sld [smem:[#allocation3 + $0x15]]
    %v163 = vstv %s160
    %v164 = vstv %s159
    %v165 = vsel %vm32, %v163, %v164
    %v166 = vstv %s162
    %v167 = vstv %s161
    %v168 = vsel %vm32, %v166, %v167
    %v169 = vsel %vm30, %v165, %v168
    %v170 = vmul.f32 %v169, %v157
    %v171 = vmul.f32 %v169, %v158
    %v172 = vadd.f32 %v143, %v170
    %v173 = vadd.f32 %v144, %v171
    %174 = vrot.lane.b32.xlu0 %v118, 92
    %v175 = vpop.permute.xlu0 %174
    %176 = vrot.lane.b32.xlu0 %v119, 92
    %v177 = vpop.permute.xlu0 %176
    %180 = vrot.lane.b32.xlu0 %v118, 124
    %v181 = vpop.permute.xlu0 %180
    %182 = vrot.lane.b32.xlu0 %v119, 124
    %v183 = vpop.permute.xlu0 %182
    %v186 = vsel %vm30, %v175, %v181
    %v187 = vsel %vm30, %v177, %v183
    %s188 = sld [smem:[#allocation3 + $0xc]]
    %s189 = sld [smem:[#allocation3 + $0xd]]
    %s190 = sld [smem:[#allocation3 + $0x12]]
    %s191 = sld [smem:[#allocation3 + $0x13]]
    %v192 = vstv %s189
    %v193 = vstv %s188
    %v194 = vsel %vm32, %v192, %v193
    %v195 = vstv %s191
    %v196 = vstv %s190
    %v197 = vsel %vm32, %v195, %v196
    %v198 = vsel %vm30, %v194, %v197
    %v199 = vmul.f32 %v198, %v186
    %v200 = vmul.f32 %v198, %v187
    %v201 = vadd.f32 %v172, %v199
    %v202 = vadd.f32 %v173, %v200
    %v203 = vld [vmem:[%s0 + $0x2] sm:$0xff]
    %v204 = vld [vmem:[%s0 + $0xa] sm:$0xff]
    %207 = vrot.lane.b32.xlu0 %v203, 96
    %v208 = vpop.permute.xlu0 %207
    %209 = vrot.lane.b32.xlu0 %v204, 96
    %v210 = vpop.permute.xlu0 %209
    %v213 = vsel %vm30, %v208, %v203
    %v214 = vsel %vm30, %v210, %v204
    %s215 = sld [smem:[#allocation3 + $0x4]]
    %s216 = sld [smem:[#allocation3 + $0x5]]
    %s217 = sld [smem:[#allocation3 + $0xa]]
    %s218 = sld [smem:[#allocation3 + $0xb]]
    %v219 = vstv %s216
    %v220 = vstv %s215
    %v221 = vsel %vm32, %v219, %v220
    %v222 = vstv %s218
    %v223 = vstv %s217
    %v224 = vsel %vm32, %v222, %v223
    %v225 = vsel %vm30, %v221, %v224
    %v226 = vmul.f32 %v225, %v213
    %v227 = vmul.f32 %v225, %v214
    %v228 = vadd.f32 %v201, %v226
    %v229 = vadd.f32 %v202, %v227
    %230 = vrot.lane.b32.xlu0 %v203, 94
    %v231 = vpop.permute.xlu0 %230
    %232 = vrot.lane.b32.xlu0 %v204, 94
    %v233 = vpop.permute.xlu0 %232
    %236 = vrot.lane.b32.xlu0 %v203, 126
    %v237 = vpop.permute.xlu0 %236
    %238 = vrot.lane.b32.xlu0 %v204, 126
    %v239 = vpop.permute.xlu0 %238
    %v242 = vsel %vm30, %v231, %v237
    %v243 = vsel %vm30, %v233, %v239
    %s244 = sld [smem:[#allocation3 + $0x2]]
    %s245 = sld [smem:[#allocation3 + $0x3]]
    %s246 = sld [smem:[#allocation3 + $0x8]]
    %s247 = sld [smem:[#allocation3 + $0x9]]
    %v248 = vstv %s245
    %v249 = vstv %s244
    %v250 = vsel %vm32, %v248, %v249
    %v251 = vstv %s247
    %v252 = vstv %s246
    %v253 = vsel %vm32, %v251, %v252
    %v254 = vsel %vm30, %v250, %v253
    %v255 = vmul.f32 %v254, %v242
    %v256 = vmul.f32 %v254, %v243
    %v257 = vadd.f32 %v228, %v255
    %v258 = vadd.f32 %v229, %v256
    %259 = vrot.lane.b32.xlu0 %v203, 92
    %v260 = vpop.permute.xlu0 %259
    %261 = vrot.lane.b32.xlu0 %v204, 92
    %v262 = vpop.permute.xlu0 %261
    %265 = vrot.lane.b32.xlu0 %v203, 124
    %v266 = vpop.permute.xlu0 %265
    %267 = vrot.lane.b32.xlu0 %v204, 124
    %v268 = vpop.permute.xlu0 %267
    %v271 = vsel %vm30, %v260, %v266
    %v272 = vsel %vm30, %v262, %v268
    %s273 = sld [smem:[#allocation3]]
    %s274 = sld [smem:[#allocation3 + $0x1]]
    %s275 = sld [smem:[#allocation3 + $0x6]]
    %s276 = sld [smem:[#allocation3 + $0x7]]
    %v277 = vstv %s274
    %v278 = vstv %s273
    %v279 = vsel %vm32, %v277, %v278
    %v280 = vstv %s276
    %v281 = vstv %s275
    %v282 = vsel %vm32, %v280, %v281
    %v283 = vsel %vm30, %v279, %v282
    %v284 = vmul.f32 %v283, %v271
    %v285 = vmul.f32 %v283, %v272
    %v286 = vadd.f32 %v257, %v284
    %v287 = vadd.f32 %v258, %v285
    %s288 = sld [smem:[#allocation2]]
    %v289 = vstv %s288
    %v290 = vadd.f32 %v286, %v289
    %v291 = vadd.f32 %v287, %v289
    %v292 = vxor.u32 %v290, 2147483648
    %v293 = vxor.u32 %v291, 2147483648
    %v294 = vmul.f32 %v292, 1.442695
    %v295 = vpow.pop %v294
    %v296 = vmul.f32 %v293, 1.442695
    %v297 = vpow.pop %v296
    %v298 = vadd.f32 %v295, 1.0
    %v299 = vadd.f32 %v297, 1.0
    %v300 = vrcp.pop %v298
    %v301 = vmul.f32 %v298, %v300
    %v302 = vsub.f32 1.0, %v301
    %v303 = vmul.f32 %v300, %v302
    %v304 = vadd.f32 %v300, %v303
    %vm305 = vweird.f32 %v298
    %vm306 = vweird.f32 %v300
    %vm307 = vmor %vm305, %vm306
    %v308 = vsel %vm307, %v300, %v304
    %v309 = vand.u32 2147483647, %v298
    %vm310 = vcmp.eq.f32.partialorder %v309, 8.507059e+37
    %v311 = vand.u32 %v298, 2147483648
    %v312 = vor.u32 1.1754944e-38, %v311
    %v313 = vsel %vm310, %v312, %v308
    %v314 = vmul.f32 1.0, %v313
    %v315 = vrcp.pop %v299
    %v316 = vmul.f32 %v299, %v315
    %v317 = vsub.f32 1.0, %v316
    %v318 = vmul.f32 %v315, %v317
    %v319 = vadd.f32 %v315, %v318
    %vm320 = vweird.f32 %v299
    %vm321 = vweird.f32 %v315
    %vm322 = vmor %vm320, %vm321
    %v323 = vsel %vm322, %v315, %v319
    %v324 = vand.u32 2147483647, %v299
    %vm325 = vcmp.eq.f32.partialorder %v324, 8.507059e+37
    %v326 = vand.u32 %v299, 2147483648
    %v327 = vor.u32 1.1754944e-38, %v326
    %v328 = vsel %vm325, %v327, %v323
    %v329 = vmul.f32 1.0, %v328
    %v330 = vmul.f32 %v290, %v314
    %v331 = vmul.f32 %v291, %v329
    %vm332 = vcmask 523264
    %333 = vst.msk [vmem:[%s3] sm:$0xff] %vm332, %v330
    %334 = vst.msk [vmem:[%s3 + $0x8] sm:$0xff] %vm332, %v331
    // Predicated region
    $region18: #{conv_transpose_silu.1} parent=1 // pred_check
      _
    $region19: #{conv_transpose_silu.1} parent=1 // pred_check_branch
      %336 = sbr.rel (0) target = $region21
    $region20: #{conv_transpose_silu.1} parent=1 // pred_region
      _
    $region21: #{conv_transpose_silu.1} parent=1 // pred_fallthru
      _
    // Predicated region
    $region22: #{conv_transpose_silu.1} parent=1 // pred_check
      _
    $region23: #{conv_transpose_silu.1} parent=1 // pred_check_branch
      %338 = sbr.rel (0) target = $region25
    $region24: #{conv_transpose_silu.1} parent=1 // pred_region
      _
    $region25: #{conv_transpose_silu.1} parent=1 // pred_fallthru
      _
    %339 = vsyncpa [#allocation4], 1

</llo_original>
